<compile_context>
chip_gen: v6e
topology: v6e:2x2x1
jax: 0.10.0
libtpu: 0.0.40
codegen_flags: <defaults>
</compile_context>

<pallas_src>
import jax
import jax.numpy as jnp
from jax.experimental import pallas as pl
from jax.experimental.pallas import tpu as pltpu


def _round_up(x, m):
    return ((x + m - 1) // m) * m


def _pick_divisor(total, candidates):
    for c in candidates:
        if c <= total and total % c == 0:
            return c
    return total


# ---------------------------------------------------------------------------
# Kernels
# ---------------------------------------------------------------------------
def _residual_linear_kernel_f32out(x_lhs_ref, w_ref, b_ref, x_res_ref, o_ref):
    """f32 output: accumulate straight into the resident output block.

    The output's (i, j) block index is constant across the k axis, so the
    block stays in VMEM for the whole K loop; bias + residual are folded into
    the k == 0 initialization — no scratch accumulator, no finalize copy.
    """
    k = pl.program_id(2)

    @pl.when(k == 0)
    def _init():
        o_ref[...] = (jnp.broadcast_to(b_ref[...], o_ref.shape)
                      + x_res_ref[...].astype(jnp.float32))

    o_ref[...] += jnp.dot(x_lhs_ref[...], w_ref[...],
                          preferred_element_type=jnp.float32)


def _residual_linear_kernel_acc(x_lhs_ref, w_ref, b_ref, x_res_ref, o_ref,
                                acc_ref):
    """Generic output dtype: f32 VMEM accumulator, single cast at finalize."""
    k = pl.program_id(2)

    @pl.when(k == 0)
    def _init():
        acc_ref[...] = jnp.broadcast_to(b_ref[...], acc_ref.shape)

    acc_ref[...] += jnp.dot(x_lhs_ref[...], w_ref[...],
                            preferred_element_type=jnp.float32)

    @pl.when(k == pl.num_programs(2) - 1)
    def _finalize():
        o_ref[...] = (acc_ref[...]
                      + x_res_ref[...].astype(jnp.float32)).astype(o_ref.dtype)


# ---------------------------------------------------------------------------
# Wrappers
# ---------------------------------------------------------------------------
def prepare_residual_linear_params(w, b, compute_dtype=jnp.bfloat16):
    """One-time weight/bias prep: pad feature dims to a 128 multiple, cast the
    weight to the MXU operand dtype, keep the bias in f32.

    Call this at module init / parameter load — not per forward call.
    """
    H = w.shape[0]
    assert w.shape == (H, H) and b.shape == (H,)
    H_pad = _round_up(H, 128)
    if H_pad != H:
        w = jnp.pad(w, ((0, H_pad - H), (0, H_pad - H)))
        b = jnp.pad(b, (0, H_pad - H))
    w_p = w.astype(compute_dtype)
    b_p = b.reshape(1, H_pad).astype(jnp.float32)
    return w_p, b_p


def residual_linear_prepared(x, w_p, b_p):
    """out = x @ W + b + x using pre-padded / pre-cast (w_p, b_p)."""
    *lead, H = x.shape
    H_pad = w_p.shape[0]
    assert w_p.shape == (H_pad, H_pad) and b_p.shape == (1, H_pad)
    assert H_pad >= H

    compute_dtype = w_p.dtype
    out_dtype = x.dtype
    accumulate_in_out = (out_dtype == jnp.float32)

    M = 1
    for d in lead:
        M *= int(d)
    x2 = x.reshape(M, H)

    # LHS for the MXU: contraction axis zero-padded to H_pad (exactness of the
    # dot) and cast to the MXU operand dtype.  The residual stays as the raw,
    # unpadded x (no M padding, no output slice afterwards).
    if H_pad != H:
        x_lhs = jnp.pad(x2, ((0, 0), (0, H_pad - H))).astype(compute_dtype)
    else:
        x_lhs = x2.astype(compute_dtype)

    # ------------------ generation-aware tile selection ---------------------
    in_bytes = jnp.dtype(compute_dtype).itemsize
    res_bytes = jnp.dtype(x.dtype).itemsize
    out_bytes = jnp.dtype(out_dtype).itemsize

    try:
        vmem_cap = pltpu.get_tpu_info().vmem_capacity_bytes
    except Exception:            # conservative (v7x per-TC sized) fallback
        vmem_cap = 64 * 1024 * 1024
    try:
        kind = jax.devices()[0].device_kind.lower()
    except Exception:
        kind = ""
    is_v5 = "v5" in kind

    # Leave headroom for Mosaic-internal scratch / pipeline bookkeeping.
    vmem_budget = (vmem_cap * 3) // 5

    if is_v5:
        # v5e is ~compute-bound already at 512^2 bf16 tiles; spend VMEM on a
        # wider K tile instead (fewer grid steps, less per-step overhead).
        tn_cands = (512, 256, 128)
        tk_cands = (1024, 512, 256, 128)
        tm_cap = 512
    else:
        # v6e (128 MiB VMEM) wants >=1024 M/N tiles to cross its MXU:HBM
        # crossover; v7x (64 MiB/TC) is compute-bound around 768 so 1024 is
        # the sweet spot and the footprint still fits comfortably.
        tn_cands = (1024, 512, 256, 128)
        tk_cands = (512, 256, 128)
        tm_cap = 1024

    tn = _pick_divisor(H_pad, tn_cands)
    tk = _pick_divisor(H_pad, tk_cands)
    tm = M if M <= tm_cap else tm_cap       # tm_cap is a multiple of 16 (bf16)

    def footprint(tm_, tn_, tk_):
        lhs = 2 * tm_ * tk_ * in_bytes       # double-buffered LHS tile
        rhs = 2 * tk_ * tn_ * in_bytes       # double-buffered weight tile
        bias = 2 * tn_ * 4                   # bias row (f32)
        res = 2 * tm_ * tn_ * res_bytes      # residual tile
        out = 2 * tm_ * tn_ * out_bytes      # output tile
        acc = 0 if accumulate_in_out else tm_ * tn_ * 4
        return lhs + rhs + bias + res + out + acc

    while footprint(tm, tn, tk) > vmem_budget:
        if tm > 256:
            tm //= 2
        elif tn > 128:
            tn //= 2
        elif tk > 128:
            tk //= 2
        else:
            break

    grid = (pl.cdiv(M, tm), H_pad // tn, H_pad // tk)

    in_specs = [
        pl.BlockSpec((tm, tk), lambda i, j, k: (i, k)),   # LHS (K zero-padded)
        pl.BlockSpec((tk, tn), lambda i, j, k: (k, j)),   # weight tile
        pl.BlockSpec((1, tn), lambda i, j, k: (0, j)),    # bias row (f32)
        pl.BlockSpec((tm, tn), lambda i, j, k: (i, j)),   # residual (unpadded)
    ]
    out_spec = pl.BlockSpec((tm, tn), lambda i, j, k: (i, j))

    if accumulate_in_out:
        kernel = _residual_linear_kernel_f32out
        scratch_shapes = []
    else:
        kernel = _residual_linear_kernel_acc
        scratch_shapes = [pltpu.VMEM((tm, tn), jnp.float32)]

    fp = footprint(tm, tn, tk)
    vmem_limit = int(min(vmem_cap * 7 // 8,
                         max(fp * 3 // 2 + (8 << 20), 48 << 20)))

    cost = pl.CostEstimate(
        flops=2 * M * H_pad * H_pad,
        transcendentals=0,
        bytes_accessed=((H_pad // tn) * M * H_pad * in_bytes   # LHS re-reads
                        + H_pad * H_pad * in_bytes             # weights
                        + H_pad * 4                            # bias
                        + M * H * res_bytes                    # residual
                        + M * H * out_bytes),                  # output
    )

    out2 = pl.pallas_call(
        kernel,
        out_shape=jax.ShapeDtypeStruct((M, H), out_dtype),
        grid_spec=pltpu.PrefetchScalarGridSpec(
            num_scalar_prefetch=0,
            grid=grid,
            in_specs=in_specs,
            out_specs=out_spec,
            scratch_shapes=scratch_shapes,
        ),
        compiler_params=pltpu.CompilerParams(
            dimension_semantics=("parallel", "parallel", "arbitrary"),
            vmem_limit_bytes=vmem_limit,
        ),
        cost_estimate=cost,
    )(x_lhs, w_p, b_p, x2)

    return out2.reshape(x.shape)


def residual_linear(x, w, b, *, compute_dtype=jnp.bfloat16):
    """Convenience wrapper: out = x @ w + b + x (Residual(Linear) forward).

    compute_dtype: MXU operand dtype.  bfloat16 (default) is MXU-native on
    v5e/v6e/v7x; accumulation and the bias/residual adds stay in f32.  Pass
    compute_dtype=jnp.float32 as an explicit high-precision escape hatch.

    For repeated calls, hoist prepare_residual_linear_params() to init time
    and call residual_linear_prepared() directly (avoids a per-call weight
    pad + cast pass over HBM).
    """
    w_p, b_p = prepare_residual_linear_params(w, b, compute_dtype)
    return residual_linear_prepared(x, w_p, b_p)


if __name__ == "__main__":
    key = jax.random.PRNGKey(0)
    k_x, k_w, k_b = jax.random.split(key, 3)

    # Small canonical Residual(Linear) shapes: batch=2, seq=8, hidden=32.
    B, S, H = 2, 8, 32
    x = jax.random.normal(k_x, (B, S, H), dtype=jnp.float32)
    w = jax.random.normal(k_w, (H, H), dtype=jnp.float32) * (1.0 / H ** 0.5)
    b = jax.random.normal(k_b, (H,), dtype=jnp.float32) * 0.01

    ref = (jnp.einsum("bsh,hk->bsk", x, w,
                      precision=jax.lax.Precision.HIGHEST) + b + x)
    out = jax.block_until_ready(residual_linear(x, w, b))   # bf16 MXU default
    assert out.shape == x.shape and out.dtype == x.dtype
    assert jnp.allclose(out, ref, atol=5e-2, rtol=5e-2), "small bf16 mismatch"

    # Multi-tile grid + hoisted-params path (M=320 rows, H=384 -> 3 N-tiles x
    # 3 K-tiles, exercises the pl.when init / accumulate / boundary clipping).
    B2, S2, H2 = 2, 160, 384
    k_x2, k_w2, k_b2 = jax.random.split(jax.random.PRNGKey(1), 3)
    x2 = jax.random.normal(k_x2, (B2, S2, H2), dtype=jnp.float32)
    w2 = jax.random.normal(k_w2, (H2, H2), dtype=jnp.float32) * (1.0 / H2 ** 0.5)
    b2 = jax.random.normal(k_b2, (H2,), dtype=jnp.float32) * 0.01
    ref2 = (jnp.einsum("bsh,hk->bsk", x2, w2,
                       precision=jax.lax.Precision.HIGHEST) + b2 + x2)

    w2_p, b2_p = prepare_residual_linear_params(w2, b2)      # hoisted once
    out2 = jax.block_until_ready(residual_linear_prepared(x2, w2_p, b2_p))
    assert jnp.allclose(out2, ref2, atol=5e-2, rtol=5e-2), "tiled bf16 mismatch"

    # High-precision escape hatch (f32 MXU operands; Mosaic may decompose the
    # f32 matmul into bf16 passes, so keep the tolerance moderate).
    out2_hp = jax.block_until_ready(
        residual_linear(x2, w2, b2, compute_dtype=jnp.float32))
    assert jnp.allclose(out2_hp, ref2, atol=1e-2, rtol=1e-2), "f32 mismatch"

    # bf16 activations exercise the scratch-accumulator kernel variant.
    x2_bf = x2.astype(jnp.bfloat16)
    out2_bf = jax.block_until_ready(residual_linear(x2_bf, w2, b2))
    assert out2_bf.dtype == jnp.bfloat16
    ref2_bf = (jnp.einsum("bsh,hk->bsk", x2_bf.astype(jnp.float32), w2,
                          precision=jax.lax.Precision.HIGHEST)
               + b2 + x2_bf.astype(jnp.float32))
    assert jnp.allclose(out2_bf.astype(jnp.float32), ref2_bf,
                        atol=1e-1, rtol=1e-1), "bf16 activations mismatch"

    print("KERNEL_OK")
</pallas_src>

<mosaic_0001>
module attributes {stable_mosaic.version = 11 : i64} {
  func.func @_residual_linear_kernel_f32out(%arg0: i32, %arg1: i32, %arg2: i32, %arg3: memref<16x128xbf16, #tpu.memory_space<vmem>>, %arg4: memref<128x128xbf16, #tpu.memory_space<vmem>>, %arg5: memref<1x128xf32, #tpu.memory_space<vmem>>, %arg6: memref<16x128xf32, #tpu.memory_space<vmem>>, %arg7: memref<16x128xf32, #tpu.memory_space<vmem>>) attributes {dimension_semantics = [#tpu.dimension_semantics<parallel>, #tpu.dimension_semantics<parallel>, #tpu.dimension_semantics<arbitrary>], iteration_bounds = array<i64: 1, 1, 1>, scalar_prefetch = 0 : i64, scratch_operands = 0 : i64, tpu.core_type = #tpu.core_type<tc>, window_params = [{transform_indices = @transform_0, window_bounds = array<i64: 16, 128>}, {transform_indices = @transform_1, window_bounds = array<i64: 128, 128>}, {transform_indices = @transform_2, window_bounds = array<i64: 1, 128>}, {transform_indices = @transform_3, window_bounds = array<i64: 16, 128>}, {transform_indices = @transform_4, window_bounds = array<i64: 16, 128>}]} {
    %c0_i32 = arith.constant 0 : i32
    %0 = arith.cmpi eq, %arg2, %c0_i32 : i32
    %1 = arith.extui %0 : i1 to i32
    %c0_i32_0 = arith.constant 0 : i32
    %2 = arith.cmpi ne, %1, %c0_i32_0 : i32
    scf.if %2 {
      %c0_8 = arith.constant 0 : index
      %c0_9 = arith.constant 0 : index
      %9 = vector.load %arg5[%c0_8, %c0_9] : memref<1x128xf32, #tpu.memory_space<vmem>>, vector<1x128xf32>
      %10 = vector.shape_cast %9 : vector<1x128xf32> to vector<1x128xf32>
      %11 = vector.broadcast %10 : vector<1x128xf32> to vector<16x128xf32>
      %c0_10 = arith.constant 0 : index
      %c0_11 = arith.constant 0 : index
      %12 = vector.load %arg6[%c0_10, %c0_11] : memref<16x128xf32, #tpu.memory_space<vmem>>, vector<16x128xf32>
      %13 = arith.addf %11, %12 : vector<16x128xf32>
      %c0_12 = arith.constant 0 : index
      %c0_13 = arith.constant 0 : index
      %14 = vector.load %arg7[%c0_12, %c0_13] : memref<16x128xf32, #tpu.memory_space<vmem>>, vector<16x128xf32>
      tpu.vector_store %arg7[%c0_12, %c0_13], %13 {strides = array<i32>} : memref<16x128xf32, #tpu.memory_space<vmem>>, vector<16x128xf32>,
    } else {
    }
    %c0 = arith.constant 0 : index
    %c0_1 = arith.constant 0 : index
    %3 = vector.load %arg7[%c0, %c0_1] : memref<16x128xf32, #tpu.memory_space<vmem>>, vector<16x128xf32>
    %c0_2 = arith.constant 0 : index
    %c0_3 = arith.constant 0 : index
    %4 = vector.load %arg3[%c0_2, %c0_3] : memref<16x128xbf16, #tpu.memory_space<vmem>>, vector<16x128xbf16>
    %c0_4 = arith.constant 0 : index
    %c0_5 = arith.constant 0 : index
    %5 = vector.load %arg4[%c0_4, %c0_5] : memref<128x128xbf16, #tpu.memory_space<vmem>>, vector<128x128xbf16>
    %cst = arith.constant dense<0.000000e+00> : vector<16x128xf32>
    %6 = tpu.matmul %4, %5, %cst {dimension_numbers = #tpu.dot_dimension_numbers<[1], [0], [0], [1], [0, 0, 1, 1], [], []>} : vector<16x128xbf16>, vector<128x128xbf16>, vector<16x128xf32> -> vector<16x128xf32>
    %7 = arith.addf %3, %6 : vector<16x128xf32>
    %c0_6 = arith.constant 0 : index
    %c0_7 = arith.constant 0 : index
    %8 = vector.load %arg7[%c0_6, %c0_7] : memref<16x128xf32, #tpu.memory_space<vmem>>, vector<16x128xf32>
    tpu.vector_store %arg7[%c0_6, %c0_7], %7 {strides = array<i32>} : memref<16x128xf32, #tpu.memory_space<vmem>>, vector<16x128xf32>,
    return
  }
  func.func @transform_0(%arg0: i32, %arg1: i32, %arg2: i32) -> (i32, i32) {
    %c0_i32 = arith.constant 0 : i32
    return %arg0, %arg2 : i32, i32
  }
  func.func @transform_1(%arg0: i32, %arg1: i32, %arg2: i32) -> (i32, i32) {
    %c0_i32 = arith.constant 0 : i32
    return %arg2, %arg1 : i32, i32
  }
  func.func @transform_2(%arg0: i32, %arg1: i32, %arg2: i32) -> (i32, i32) {
    %c0_i32 = arith.constant 0 : i32
    %c0_i32_0 = arith.constant 0 : i32
    return %c0_i32, %arg1 : i32, i32
  }
  func.func @transform_3(%arg0: i32, %arg1: i32, %arg2: i32) -> (i32, i32) {
    %c0_i32 = arith.constant 0 : i32
    return %arg0, %arg1 : i32, i32
  }
  func.func @transform_4(%arg0: i32, %arg1: i32, %arg2: i32) -> (i32, i32) {
    %c0_i32 = arith.constant 0 : i32
    return %arg0, %arg1 : i32, i32
  }
}

</mosaic_0001>

<llo_original>
// kernel: tpu_custom_call.1
$region0: #{tpu_custom_call.1}
  #allocation0 [shape = 'u32[]', space=smem, size = 0x4, offset = 0x4, fixed_abs, tag = 'smem constant byte address 0x4 - core index']
  #allocation1 [shape = 'u32[144,128]{1,0:T(1,128)}', space=vmem, size = 0x12000, scoped, tag = 'internal scratch']
  %s0 = inlined_call_operand.hbm [shape: bf16[16,128], index: 0, kind: input, shape index: {}]
  %s1 = inlined_call_operand.hbm [shape: bf16[128,128], index: 1, kind: input, shape index: {}]
  %s2 = inlined_call_operand.vmem [shape: f32[1,128], index: 2, kind: input, shape index: {}]
  %s3 = inlined_call_operand.hbm [shape: f32[16,32], index: 3, kind: input, shape index: {}]
  %s4 = inlined_call_operand.hbm [shape: f32[16,32], index: 4, kind: output, shape index: {}]
  %s5 = sld [smem:[#allocation0]]
  $region42: #{tpu_custom_call.1} parent=0
    _
  %s7 = ssub.s32 1, %s5
  %s8 = scalar_select 0, %s7, %s5
  $region1: #{tpu_custom_call.1} parent=0
    #allocation2 [shape = 'u8[4096]{0}', space=vmem, size = 0x1000, scoped, tag = 'input window, operand 0, single buffered']
    #allocation3 [shape = 's32[1]{0}', space=sflag, size = 0x4, scoped, tag = 'scoped memory for tpu_custom_call.1']
    #allocation4 [shape = 's32[1]{0}', space=sflag, size = 0x4, scoped, tag = 'scoped memory for tpu_custom_call.1']
    #allocation5 [shape = 'u8[32768]{0}', space=vmem, size = 0x8000, scoped, tag = 'input window, operand 1, single buffered']
    #allocation6 [shape = 's32[1]{0}', space=sflag, size = 0x4, scoped, tag = 'scoped memory for tpu_custom_call.1']
    #allocation7 [shape = 'u8[8192]{0}', space=vmem, size = 0x2000, scoped, tag = 'input window, operand 3, single buffered']
    #allocation8 [shape = 'u8[8192]{0}', space=vmem, size = 0x2000, scoped, tag = 'output window, operand 0, single buffered']
    %9 = vsyncpa [#allocation3], 0
    %10 = vsyncpa [#allocation6], 0
    %11 = vsyncpa [#allocation4], 0
    // Predicated region
    $region2: #{tpu_custom_call.1} parent=1 // pred_check
      _
    $region3: #{tpu_custom_call.1} parent=1 // pred_check_branch
      %13 = sbr.rel (0) target = $region5
    $region4: #{tpu_custom_call.1} parent=1 // pred_region
      %s15 = ssub.s32 128, 128
      %16 = vsyncadd [#allocation3], %s15
      %s17 = sshll.u32 [#allocation2], 4
      %s18 = int_to_ptr.vmem [resolvable:$true] %s17
      %23 = dma.hbm_to_vmem [thread:$0]  %s0, 128, %s18, [#allocation3], 64, 64, 4
    $region5: #{tpu_custom_call.1} parent=1 // pred_fallthru
      _
    // Predicated region
    $region6: #{tpu_custom_call.1} parent=1 // pred_check
      _
    $region7: #{tpu_custom_call.1} parent=1 // pred_check_branch
      %25 = sbr.rel (0) target = $region9
    $region8: #{tpu_custom_call.1} parent=1 // pred_region
      %s27 = ssub.s32 1024, 1024
      %28 = vsyncadd [#allocation6], %s27
      %s29 = sshll.u32 [#allocation5], 4
      %s30 = int_to_ptr.vmem [resolvable:$true] %s29
      %35 = dma.hbm_to_vmem [thread:$0]  %s1, 1024, %s30, [#allocation6], 64, 64, 4
    $region9: #{tpu_custom_call.1} parent=1 // pred_fallthru
      _
    // Predicated region
    $region10: #{tpu_custom_call.1} parent=1 // pred_check
      _
    $region11: #{tpu_custom_call.1} parent=1 // pred_check_branch
      %37 = sbr.rel (0) target = $region13
    $region12: #{tpu_custom_call.1} parent=1 // pred_region
      _
    $region13: #{tpu_custom_call.1} parent=1 // pred_fallthru
      _
    // Predicated region
    $region14: #{tpu_custom_call.1} parent=1 // pred_check
      _
    $region15: #{tpu_custom_call.1} parent=1 // pred_check_branch
      %39 = sbr.rel (0) target = $region17
    $region16: #{tpu_custom_call.1} parent=1 // pred_region
      %s41 = ssub.s32 256, 256
      %42 = vsyncadd [#allocation6], %s41
      %s43 = sshll.u32 [#allocation7], 4
      %s44 = int_to_ptr.vmem [resolvable:$true] %s43
      %49 = dma.hbm_to_vmem [thread:$0]  %s3, 256, %s44, [#allocation6], 128, 128, 8
    $region17: #{tpu_custom_call.1} parent=1 // pred_fallthru
      _
    // Predicated region
    $region18: #{tpu_custom_call.1} parent=1 // pred_check
      _
    $region19: #{tpu_custom_call.1} parent=1 // pred_check_branch
      %51 = sbr.rel (0) target = $region21
    $region20: #{tpu_custom_call.1} parent=1 // pred_region
      %52 = dma.done [#allocation3], 128
    $region21: #{tpu_custom_call.1} parent=1 // pred_fallthru
      _
    // Predicated region
    $region22: #{tpu_custom_call.1} parent=1 // pred_check
      _
    $region23: #{tpu_custom_call.1} parent=1 // pred_check_branch
      %54 = sbr.rel (0) target = $region25
    $region24: #{tpu_custom_call.1} parent=1 // pred_region
      %55 = dma.done [#allocation6], 1024
    $region25: #{tpu_custom_call.1} parent=1 // pred_fallthru
      _
    // Predicated region
    $region26: #{tpu_custom_call.1} parent=1 // pred_check
      _
    $region27: #{tpu_custom_call.1} parent=1 // pred_check_branch
      %57 = sbr.rel (0) target = $region29
    $region28: #{tpu_custom_call.1} parent=1 // pred_region
      %58 = dma.done [#allocation6], 256
    $region29: #{tpu_custom_call.1} parent=1 // pred_fallthru
      _
    %p60 = scmp.eq.s32.totalorder 0, 0
    // Predicated region
    $region30: #{tpu_custom_call.1} parent=1 // pred_check
      %p61 = pneg %p60
    $region31: #{tpu_custom_call.1} parent=1 // pred_check_branch
      %63 = sbr.rel (%p61) target = $region33
    $region32: #{tpu_custom_call.1} parent=1 // pred_region
      %v64 = vld [vmem:[%s2] sm:$0x1]
      %v66 = vlaneseq
      %v67 = vshrl.u32 %v66, 7
      %v68 = vsub.s32 0, %v67
      %v69 = vrot.slane %v64, %v68
      %v71 = vld [vmem:[#allocation7] sm:$0xff]
      %v72 = vld [vmem:[#allocation7 + $0x8] sm:$0xff]
      %v73 = vadd.f32 %v69, %v71
      %v74 = vadd.f32 %v69, %v72
      %75 = vst [vmem:[#allocation8] sm:$0xff] %v73
      %76 = vst [vmem:[#allocation8 + $0x8] sm:$0xff] %v74
    $region33: #{tpu_custom_call.1} parent=1 // pred_fallthru
      _
    %v77 = vld [vmem:[#allocation8] sm:$0xff]
    %v78 = vld [vmem:[#allocation8 + $0x8] sm:$0xff]
    %v79 = vld [vmem:[#allocation2] sm:$0xf]
    %v80 = vld [vmem:[#allocation2 + $0x4] sm:$0xf]
    %v81 = vld [vmem:[#allocation5] sm:$0xf]
    %v82 = vld [vmem:[#allocation5 + $0x4] sm:$0xf]
    %v83 = vld [vmem:[#allocation5 + $0x8] sm:$0xf]
    %v84 = vld [vmem:[#allocation5 + $0xc] sm:$0xf]
    %v85 = vld [vmem:[#allocation5 + $0x10] sm:$0xf]
    %v86 = vld [vmem:[#allocation5 + $0x14] sm:$0xf]
    %v87 = vld [vmem:[#allocation5 + $0x18] sm:$0xf]
    %v88 = vld [vmem:[#allocation5 + $0x1c] sm:$0xf]
    %v89 = vld [vmem:[#allocation5 + $0x20] sm:$0xf]
    %v90 = vld [vmem:[#allocation5 + $0x24] sm:$0xf]
    %v91 = vld [vmem:[#allocation5 + $0x28] sm:$0xf]
    %v92 = vld [vmem:[#allocation5 + $0x2c] sm:$0xf]
    %v93 = vld [vmem:[#allocation5 + $0x30] sm:$0xf]
    %v94 = vld [vmem:[#allocation5 + $0x34] sm:$0xf]
    %v95 = vld [vmem:[#allocation5 + $0x38] sm:$0xf]
    %v96 = vld [vmem:[#allocation5 + $0x3c] sm:$0xf]
    %v99 = vunpack.c.l.b16 %v79
    %v100 = vunpack.c.l.b16 %v80
    %v101 = vpack.c.b16 %v100, %v99
    %v119 = vunpack.c.l.b16 %v81
    %v120 = vunpack.c.l.b16 %v82
    %v121 = vunpack.c.l.b16 %v83
    %v122 = vunpack.c.l.b16 %v84
    %v123 = vunpack.c.l.b16 %v85
    %v124 = vunpack.c.l.b16 %v86
    %v125 = vunpack.c.l.b16 %v87
    %v126 = vunpack.c.l.b16 %v88
    %v127 = vunpack.c.l.b16 %v89
    %v128 = vunpack.c.l.b16 %v90
    %v129 = vunpack.c.l.b16 %v91
    %v130 = vunpack.c.l.b16 %v92
    %v131 = vunpack.c.l.b16 %v93
    %v132 = vunpack.c.l.b16 %v94
    %v133 = vunpack.c.l.b16 %v95
    %v134 = vunpack.c.l.b16 %v96
    %v135 = vpack.c.b16 %v120, %v119
    %v136 = vpack.c.b16 %v122, %v121
    %v137 = vpack.c.b16 %v124, %v123
    %v138 = vpack.c.b16 %v126, %v125
    %v139 = vpack.c.b16 %v128, %v127
    %v140 = vpack.c.b16 %v130, %v129
    %v141 = vpack.c.b16 %v132, %v131
    %v142 = vpack.c.b16 %v134, %v133
    %151 = vmatprep.subr.bf16.mxu0 0
    %152 = vmatpush1.bf16.msra.mxu0 %v142
    %153 = vmatprep.subr.bf16.mxu0 0
    %154 = vmatpush1.bf16.msra.mxu0 %v141
    %155 = vmatprep.subr.bf16.mxu0 0
    %156 = vmatpush1.bf16.msra.mxu0 %v140
    %157 = vmatprep.subr.bf16.mxu0 0
    %158 = vmatpush1.bf16.msra.mxu0 %v139
    %159 = vmatprep.subr.bf16.mxu0 0
    %160 = vmatpush1.bf16.msra.mxu0 %v138
    %161 = vmatprep.subr.bf16.mxu0 0
    %162 = vmatpush1.bf16.msra.mxu0 %v137
    %163 = vmatprep.subr.bf16.mxu0 0
    %164 = vmatpush1.bf16.msra.mxu0 %v136
    %165 = vmatprep.subr.bf16.mxu0 0
    %166 = vmatpush1.bf16.msra.mxu0 %v135
    %167 = vmatprep.subr.bf16.mxu0 0
    %168 = vmatpush2.bf16.msra.mxu0 0
    %169 = vmatprep.subr.bf16.mxu0 0
    %170 = vmatpush2.bf16.msra.mxu0 0
    %171 = vmatprep.subr.bf16.mxu0 0
    %172 = vmatpush2.bf16.msra.mxu0 0
    %173 = vmatprep.subr.bf16.mxu0 0
    %174 = vmatpush2.bf16.msra.mxu0 0
    %175 = vmatprep.subr.bf16.mxu0 0
    %176 = vmatpush2.bf16.msra.mxu0 0
    %177 = vmatprep.subr.bf16.mxu0 0
    %178 = vmatpush2.bf16.msra.mxu0 0
    %179 = vmatprep.subr.bf16.mxu0 0
    %180 = vmatpush2.bf16.msra.mxu0 0
    %181 = vmatprep.subr.bf16.mxu0 0
    %182 = vmatpush2.bf16.msra.mxu0 0
    %183 = vmatprep.mubr.bf16.mxu0 0
    %184 = vmatmul.mubr.bf16.gmra.mxu0 %v101
    %v185 = vpop.f32.mrf.mxu0
    %v186 = vadd.f32 0.0, %v185
    %v187 = vpop.f32.mrf.mxu0
    %v188 = vpop.f32.mrf.mxu0
    %v189 = vadd.f32 0.0, %v188
    %v190 = vpop.f32.mrf.mxu0
    %191 = vdwg.mxu0
    %v192 = vadd.f32 %v77, %v186
    %v193 = vadd.f32 %v78, %v189
    %194 = vst [vmem:[#allocation8] sm:$0xff] %v192
    %195 = vst [vmem:[#allocation8 + $0x8] sm:$0xff] %v193
    // Predicated region
    $region34: #{tpu_custom_call.1} parent=1 // pred_check
      _
    $region35: #{tpu_custom_call.1} parent=1 // pred_check_branch
      %197 = sbr.rel (0) target = $region37
    $region36: #{tpu_custom_call.1} parent=1 // pred_region
      %s199 = ssub.s32 256, 256
      %200 = vsyncadd [#allocation4], %s199
      %s201 = sshll.u32 [#allocation8], 4
      %s202 = int_to_ptr.vmem [resolvable:$true] %s201
      %207 = dma.vmem_to_hbm [thread:$0]  %s202, 256, %s4, [#allocation4], 128, 128, 8
    $region37: #{tpu_custom_call.1} parent=1 // pred_fallthru
      _
    // Predicated region
    $region38: #{tpu_custom_call.1} parent=1 // pred_check
      _
    $region39: #{tpu_custom_call.1} parent=1 // pred_check_branch
      %209 = sbr.rel (0) target = $region41
    $region40: #{tpu_custom_call.1} parent=1 // pred_region
      %210 = dma.done [#allocation4], 256
    $region41: #{tpu_custom_call.1} parent=1 // pred_fallthru
      _
    %211 = vsyncpa [#allocation3], 1
    %212 = vsyncpa [#allocation6], 1
    %213 = vsyncpa [#allocation4], 1

</llo_original>
